<compile_context>
chip_gen: v5e
topology: v5e:2x2
jax: 0.10.0
libtpu: 0.0.40
codegen_flags: <defaults>
</compile_context>

<pallas_src>
import jax
import jax.numpy as jnp
from jax.experimental import pallas as pl
from jax.experimental.pallas import tpu as pltpu


_SQRT_2_OVER_PI = 0.7978845608028654
_VMEM_LIMIT = 64 * 1024 * 1024  # 64 MiB: > v5e's 16 MiB default, <= v7x physical.
_NEG_INF = -1e30


def _pick_tile(n, cap):
    """Largest clean tile: `cap` if it divides n, else the full extent."""
    if n >= cap and n % cap == 0:
        return cap
    return n


# ----------------------------------------------------------------------------
# Fused (LayerNorm ->) matmul (-> GELU) (-> +residual) kernel
# ----------------------------------------------------------------------------

def _make_linear_kernel(has_ln, has_resid, activation, eps):
    def kernel(*refs):
        x_ref, w_ref, b_ref = refs[0], refs[1], refs[2]
        idx = 3
        if has_ln:
            g_ref, be_ref = refs[idx], refs[idx + 1]
            idx += 2
        if has_resid:
            r_ref = refs[idx]
            idx += 1
        o_ref = refs[idx]
        idx += 1
        if has_ln:
            ln_ref = refs[idx]  # VMEM scratch (tm, K) bf16

        if has_ln:
            # LN is a lane-axis reduce over K; compute it once per row tile
            # (x block is resident across the N axis) and cache in VMEM.
            @pl.when(pl.program_id(1) == 0)
            def _():
                x = x_ref[...].astype(jnp.float32)
                mu = jnp.mean(x, axis=-1, keepdims=True)
                var = jnp.mean((x - mu) * (x - mu), axis=-1, keepdims=True)
                xn = (x - mu) * jax.lax.rsqrt(var + eps)
                xn = xn * g_ref[...].astype(jnp.float32) + be_ref[...].astype(jnp.float32)
                ln_ref[...] = xn.astype(jnp.bfloat16)

            x_mm = ln_ref[...]
        else:
            x_mm = x_ref[...].astype(jnp.bfloat16)

        # bf16 MXU matmul, f32 accumulation.
        y = jnp.dot(x_mm, w_ref[...], preferred_element_type=jnp.float32)
        y = y + b_ref[...].astype(jnp.float32)

        if activation == "gelu":
            # tanh-approx GELU (GPT-2)
            y = 0.5 * y * (1.0 + jnp.tanh(_SQRT_2_OVER_PI * (y + 0.044715 * y * y * y)))

        if has_resid:
            y = y + r_ref[...].astype(jnp.float32)

        o_ref[...] = y.astype(o_ref.dtype)

    return kernel


def linear(x, w, b, *, gamma=None, beta=None, residual=None, activation=None,
           out_dtype=jnp.bfloat16, tm=512, tn=512, eps=1e-5):
    """o = act(LN(x) @ w + b) + residual.

    x: (M, K) bf16, w: (K, N) bf16, b: (N,) f32.  Grid = (M tiles, N tiles);
    K is kept whole so the LayerNorm fusion sees the full feature axis.  The
    x tile is resident across the (inner, 'arbitrary') N axis and its LN is
    cached in VMEM scratch; the row axis is 'parallel' (megacore).
    """
    M, K = x.shape
    Kw, N = w.shape
    assert Kw == K
    tm = M if M <= tm else tm          # large row tile cuts weight re-streaming
    tn = N if N <= tn else tn          # lane-dense (multiple of 128) when tiled
    grid = (pl.cdiv(M, tm), pl.cdiv(N, tn))

    in_specs = [
        pl.BlockSpec((tm, K), lambda i, j: (i, 0)),
        pl.BlockSpec((K, tn), lambda i, j: (0, j)),
        pl.BlockSpec((1, tn), lambda i, j: (0, j)),
    ]
    args = [x, w, b.reshape(1, N).astype(jnp.float32)]

    has_ln = gamma is not None
    if has_ln:
        in_specs += [
            pl.BlockSpec((1, K), lambda i, j: (0, 0)),
            pl.BlockSpec((1, K), lambda i, j: (0, 0)),
        ]
        args += [gamma.reshape(1, K).astype(jnp.float32),
                 beta.reshape(1, K).astype(jnp.float32)]

    if residual is not None:
        in_specs.append(pl.BlockSpec((tm, tn), lambda i, j: (i, j)))
        args.append(residual)

    scratch_shapes = [pltpu.VMEM((tm, K), jnp.bfloat16)] if has_ln else []

    kernel = _make_linear_kernel(has_ln, residual is not None, activation, eps)
    return pl.pallas_call(
        kernel,
        out_shape=jax.ShapeDtypeStruct((M, N), out_dtype),
        grid=grid,
        in_specs=in_specs,
        out_specs=pl.BlockSpec((tm, tn), lambda i, j: (i, j)),
        scratch_shapes=scratch_shapes,
        compiler_params=pltpu.CompilerParams(
            dimension_semantics=("parallel", "arbitrary"),
            vmem_limit_bytes=_VMEM_LIMIT),
    )(*args)


# ----------------------------------------------------------------------------
# Flash-style attention kernel (grid over batch, head, q tile, kv tile)
# ----------------------------------------------------------------------------

def _make_flash_attn_kernel(scale, tq, tk, dh):
    def kernel(q_ref, k_ref, v_ref, kb_ref, o_ref, m_sc, l_sc, acc_sc):
        qi = pl.program_id(2)
        ki = pl.program_id(3)

        @pl.when(ki == 0)
        def _():
            m_sc[...] = jnp.full(m_sc.shape, -jnp.inf, dtype=m_sc.dtype)
            l_sc[...] = jnp.zeros(l_sc.shape, dtype=l_sc.dtype)
            acc_sc[...] = jnp.zeros(acc_sc.shape, dtype=acc_sc.dtype)

        # Skip KV tiles entirely above the causal diagonal.
        @pl.when(ki * tk <= qi * tq + (tq - 1))
        def _():
            q = q_ref[...].reshape(tq, dh)
            k = k_ref[...].reshape(tk, dh)
            v = v_ref[...].reshape(tk, dh)
            kb = kb_ref[...].reshape(1, tk)              # pad-key additive bias

            s = jnp.einsum("qd,kd->qk", q, k,
                           preferred_element_type=jnp.float32) * scale
            row = qi * tq + jax.lax.broadcasted_iota(jnp.int32, (tq, tk), 0)
            col = ki * tk + jax.lax.broadcasted_iota(jnp.int32, (tq, tk), 1)
            s = s + kb                                   # (tq, tk) + (1, tk)
            s = jnp.where(col > row, jnp.float32(_NEG_INF), s)

            m_prev = m_sc[...]
            m_new = jnp.maximum(m_prev, jnp.max(s, axis=-1, keepdims=True))
            alpha = jnp.exp(m_prev - m_new)
            p = jnp.exp(s - m_new)
            l_sc[...] = alpha * l_sc[...] + jnp.sum(p, axis=-1, keepdims=True)
            acc_sc[...] = alpha * acc_sc[...] + jnp.dot(
                p.astype(jnp.bfloat16), v, preferred_element_type=jnp.float32)
            m_sc[...] = m_new

        @pl.when(ki == pl.num_programs(3) - 1)
        def _():
            out = acc_sc[...] * pl.reciprocal(l_sc[...], approx=True)
            o_ref[...] = out.reshape(1, 1, tq, dh).astype(o_ref.dtype)

    return kernel


def flash_attention(q, k, v, key_bias, scale):
    """q, k, v: (B, H, S, Dh) bf16; key_bias: (B, 1, S) f32 additive (0 / -1e30).

    Returns out (B, H, S, Dh) bf16. Causal mask generated in-kernel.
    """
    B, H, S, Dh = q.shape
    tq = _pick_tile(S, 128)
    tk = _pick_tile(S, 256)
    grid = (B, H, S // tq, S // tk)
    kernel = _make_flash_attn_kernel(scale, tq, tk, Dh)

    return pl.pallas_call(
        kernel,
        out_shape=jax.ShapeDtypeStruct((B, H, S, Dh), jnp.bfloat16),
        grid=grid,
        in_specs=[
            pl.BlockSpec((1, 1, tq, Dh), lambda b, h, qi, ki: (b, h, qi, 0)),
            pl.BlockSpec((1, 1, tk, Dh), lambda b, h, qi, ki: (b, h, ki, 0)),
            pl.BlockSpec((1, 1, tk, Dh), lambda b, h, qi, ki: (b, h, ki, 0)),
            pl.BlockSpec((1, 1, tk), lambda b, h, qi, ki: (b, 0, ki)),
        ],
        out_specs=pl.BlockSpec((1, 1, tq, Dh), lambda b, h, qi, ki: (b, h, qi, 0)),
        scratch_shapes=[
            pltpu.VMEM((tq, 1), jnp.float32),    # running max
            pltpu.VMEM((tq, 1), jnp.float32),    # running denom
            pltpu.VMEM((tq, Dh), jnp.float32),   # output accumulator
        ],
        compiler_params=pltpu.CompilerParams(
            dimension_semantics=("parallel", "parallel", "parallel", "arbitrary"),
            vmem_limit_bytes=_VMEM_LIMIT),
    )(q, k, v, key_bias)


# ----------------------------------------------------------------------------
# Debug attention kernel: full-row softmax, writes exact probabilities
# ----------------------------------------------------------------------------

def _make_attn_probs_kernel(scale, tq, S, dh):
    def kernel(q_ref, k_ref, v_ref, kb_ref, o_ref, p_ref):
        qi = pl.program_id(2)
        q = q_ref[...].reshape(tq, dh)
        k = k_ref[...].reshape(S, dh)
        v = v_ref[...].reshape(S, dh)
        kb = kb_ref[...].reshape(1, S)

        s = jnp.einsum("qd,kd->qk", q, k,
                       preferred_element_type=jnp.float32) * scale
        row = qi * tq + jax.lax.broadcasted_iota(jnp.int32, (tq, S), 0)
        col = jax.lax.broadcasted_iota(jnp.int32, (tq, S), 1)
        s = s + kb
        s = jnp.where(col > row, jnp.float32(_NEG_INF), s)

        m = jnp.max(s, axis=-1, keepdims=True)
        e = jnp.exp(s - m)
        p = e / jnp.sum(e, axis=-1, keepdims=True)       # exact normalization

        out = jnp.dot(p.astype(jnp.bfloat16), v, preferred_element_type=jnp.float32)
        o_ref[...] = out.reshape(1, 1, tq, dh).astype(o_ref.dtype)
        p_ref[...] = p.reshape(1, 1, tq, S).astype(jnp.float32)

    return kernel


def attention_with_probs(q, k, v, key_bias, scale):
    """Debug path: also returns exact softmax probabilities (B, H, S, S) f32."""
    B, H, S, Dh = q.shape
    tq = _pick_tile(S, 128)
    grid = (B, H, S // tq)
    kernel = _make_attn_probs_kernel(scale, tq, S, Dh)

    out_shape = (jax.ShapeDtypeStruct((B, H, S, Dh), jnp.bfloat16),
                 jax.ShapeDtypeStruct((B, H, S, S), jnp.float32))
    out_specs = (pl.BlockSpec((1, 1, tq, Dh), lambda b, h, qi: (b, h, qi, 0)),
                 pl.BlockSpec((1, 1, tq, S), lambda b, h, qi: (b, h, qi, 0)))

    return pl.pallas_call(
        kernel,
        out_shape=out_shape,
        grid=grid,
        in_specs=[
            pl.BlockSpec((1, 1, tq, Dh), lambda b, h, qi: (b, h, qi, 0)),
            pl.BlockSpec((1, 1, S, Dh), lambda b, h, qi: (b, h, 0, 0)),
            pl.BlockSpec((1, 1, S, Dh), lambda b, h, qi: (b, h, 0, 0)),
            pl.BlockSpec((1, 1, S), lambda b, h, qi: (b, 0, 0)),
        ],
        out_specs=out_specs,
        compiler_params=pltpu.CompilerParams(
            dimension_semantics=("parallel", "parallel", "parallel"),
            vmem_limit_bytes=_VMEM_LIMIT),
    )(q, k, v, key_bias)


# ----------------------------------------------------------------------------
# GPT-2 model (parameters + forward glue around the Pallas kernels)
# ----------------------------------------------------------------------------

def init_params(key, vocab_size, max_len, num_blocks, d_model, d_ffn):
    def normal(k, shape, std=0.02):
        return (std * jax.random.normal(k, shape, dtype=jnp.float32)).astype(jnp.bfloat16)

    keys = jax.random.split(key, 2 + num_blocks)
    params = {
        "tok_emb": normal(keys[0], (vocab_size, d_model)),
        "pos_emb": normal(keys[1], (max_len, d_model)),
        "blocks": [],
        "ln_f_g": jnp.ones((d_model,), jnp.float32),
        "ln_f_b": jnp.zeros((d_model,), jnp.float32),
    }
    for bi in range(num_blocks):
        bk = jax.random.split(keys[2 + bi], 4)
        blk = {
            "ln1_g": jnp.ones((d_model,), jnp.float32),
            "ln1_b": jnp.zeros((d_model,), jnp.float32),
            # fused QKV projection: columns are [Q heads | K heads | V heads]
            "w_qkv": normal(bk[0], (d_model, 3 * d_model)),
            "b_qkv": jnp.zeros((3 * d_model,), jnp.float32),
            "wo": normal(bk[1], (d_model, d_model)),
            "bo": jnp.zeros((d_model,), jnp.float32),
            "ln2_g": jnp.ones((d_model,), jnp.float32),
            "ln2_b": jnp.zeros((d_model,), jnp.float32),
            "w1": normal(bk[2], (d_model, d_ffn)),
            "b1": jnp.zeros((d_ffn,), jnp.float32),
            "w2": normal(bk[3], (d_ffn, d_model)),
            "b2": jnp.zeros((d_model,), jnp.float32),
        }
        params["blocks"].append(blk)
    head_key = jax.random.fold_in(key, 12345)
    params["w_head"] = (0.02 * jax.random.normal(
        head_key, (d_model, vocab_size), dtype=jnp.float32)).astype(jnp.bfloat16)
    params["b_head"] = jnp.zeros((vocab_size,), jnp.float32)
    return params


class GPT2:
    def __init__(self, pad_idx, vocab_size, max_len, num_blocks, d_model,
                 d_ffn, num_heads, p_dropout, key):
        assert d_model % num_heads == 0
        self.pad_idx = pad_idx
        self.vocab_size = vocab_size
        self.max_len = max_len
        self.num_blocks = num_blocks
        self.d_model = d_model
        self.d_ffn = d_ffn
        self.num_heads = num_heads
        self.head_dim = d_model // num_heads
        self.p_dropout = p_dropout
        self.params = init_params(key, vocab_size, max_len, num_blocks, d_model, d_ffn)

    def __call__(self, x, save_attn_pattern=False):
        B, S = x.shape
        H, D, Dh = self.num_heads, self.d_model, self.head_dim
        p = self.params

        # Pad mask -> tiny additive key bias; causal mask is generated in-kernel.
        # NOTE: a query row whose reachable keys are ALL pad gets a uniform
        # softmax (same behaviour as the original additive -inf mask).
        key_bias = jnp.where(x == self.pad_idx,
                             jnp.float32(_NEG_INF), jnp.float32(0.0)).reshape(B, 1, S)

        # embeddings (gather is XLA glue)
        h = jnp.take(p["tok_emb"], x, axis=0) + p["pos_emb"][:S][None]       # (B,S,D)
        h = h.reshape(B * S, D).astype(jnp.bfloat16)

        attn_patterns = []
        scale = 1.0 / float(Dh) ** 0.5

        for blk in p["blocks"]:
            # --- masked multi-head self-attention (pre-LN, LN fused in QKV) ---
            qkv = linear(h, blk["w_qkv"], blk["b_qkv"],
                         gamma=blk["ln1_g"], beta=blk["ln1_b"])              # (B*S, 3D)
            qkv4 = qkv.reshape(B, S, 3, H, Dh)
            # head-major transform done once in XLA (not per KV tile in-kernel)
            q = jnp.transpose(qkv4[:, :, 0], (0, 2, 1, 3))                   # (B,H,S,Dh)
            k = jnp.transpose(qkv4[:, :, 1], (0, 2, 1, 3))
            v = jnp.transpose(qkv4[:, :, 2], (0, 2, 1, 3))

            if save_attn_pattern:
                o_heads, probs = attention_with_probs(q, k, v, key_bias, scale)
                attn_patterns.append(probs)                                  # (B,H,S,S)
            else:
                o_heads = flash_attention(q, k, v, key_bias, scale)

            o = jnp.transpose(o_heads, (0, 2, 1, 3)).reshape(B * S, D)
            # output projection with fused residual add
            h = linear(o, blk["wo"], blk["bo"], residual=h)

            # --- feed-forward (pre-LN fused in first matmul, residual fused in 2nd) ---
            f = linear(h, blk["w1"], blk["b1"],
                       gamma=blk["ln2_g"], beta=blk["ln2_b"], activation="gelu")
            h = linear(f, blk["w2"], blk["b2"], residual=h)

        # final LN fused into the vocab head
        logits = linear(h, p["w_head"], p["b_head"],
                        gamma=p["ln_f_g"], beta=p["ln_f_b"],
                        out_dtype=jnp.float32).reshape(B, S, self.vocab_size)

        if save_attn_pattern:
            patterns = jnp.stack(attn_patterns, axis=0)   # (num_blocks, B, H, S, S)
        else:
            patterns = jnp.zeros((0, B, H, S, S), jnp.float32)
        return logits, patterns


# ----------------------------------------------------------------------------
# main
# ----------------------------------------------------------------------------

if __name__ == "__main__":
    pad_idx = 0
    vocab_size = 64
    max_len = 16
    num_blocks = 2
    d_model = 32
    d_ffn = 64
    num_heads = 4
    p_dropout = 0.1

    B, S = 2, 8

    key = jax.random.PRNGKey(0)
    pkey, xkey = jax.random.split(key)

    model = GPT2(pad_idx, vocab_size, max_len, num_blocks, d_model,
                 d_ffn, num_heads, p_dropout, pkey)

    # tokens in [1, vocab_size) so no pad tokens (avoids fully-masked rows)
    x = jax.random.randint(xkey, (B, S), 1, vocab_size, dtype=jnp.int32)

    # debug path: exact-softmax kernel, writes attention patterns
    logits, attn = model(x, save_attn_pattern=True)
    jax.block_until_ready((logits, attn))
    assert logits.shape == (B, S, vocab_size)
    assert attn.shape == (num_blocks, B, num_heads, S, S)

    # fast path: flash-style KV-tiled attention, no probs allocated/written
    logits2, attn2 = model(x, save_attn_pattern=False)
    jax.block_until_ready((logits2, attn2))
    assert logits2.shape == (B, S, vocab_size)
    assert attn2.shape == (0, B, num_heads, S, S)

    # cross-check the two attention kernels against each other (loose tol:
    # bf16 residual stream + approx reciprocal in the flash softmax)
    max_diff = float(jnp.max(jnp.abs(logits - logits2)))
    assert max_diff < 0.05, f"flash vs exact attention mismatch: {max_diff}"

    print("KERNEL_OK")
</pallas_src>

<mosaic_0001>
module attributes {stable_mosaic.version = 11 : i64} {
  func.func @kernel(%arg0: i32, %arg1: i32, %arg2: memref<16x32xbf16, #tpu.memory_space<vmem>>, %arg3: memref<32x96xbf16, #tpu.memory_space<vmem>>, %arg4: memref<1x96xf32, #tpu.memory_space<vmem>>, %arg5: memref<1x32xf32, #tpu.memory_space<vmem>>, %arg6: memref<1x32xf32, #tpu.memory_space<vmem>>, %arg7: memref<16x96xbf16, #tpu.memory_space<vmem>>, %arg8: memref<16x32xbf16, #tpu.memory_space<vmem>>) attributes {dimension_semantics = [#tpu.dimension_semantics<parallel>, #tpu.dimension_semantics<arbitrary>], iteration_bounds = array<i64: 1, 1>, scalar_prefetch = 0 : i64, scratch_operands = 1 : i64, tpu.core_type = #tpu.core_type<tc>, window_params = [{transform_indices = @transform_0, window_bounds = array<i64: 16, 32>}, {transform_indices = @transform_1, window_bounds = array<i64: 32, 96>}, {transform_indices = @transform_2, window_bounds = array<i64: 1, 96>}, {pipeline_mode = #tpu.pipeline_mode<synchronous>, transform_indices = @transform_3, window_bounds = array<i64: 1, 32>}, {pipeline_mode = #tpu.pipeline_mode<synchronous>, transform_indices = @transform_4, window_bounds = array<i64: 1, 32>}, {transform_indices = @transform_5, window_bounds = array<i64: 16, 96>}]} {
    %c0_i32 = arith.constant 0 : i32
    %0 = arith.cmpi eq, %arg1, %c0_i32 : i32
    %1 = arith.extui %0 : i1 to i32
    %c0_i32_0 = arith.constant 0 : i32
    %2 = arith.cmpi ne, %1, %c0_i32_0 : i32
    scf.if %2 {
      %c0_8 = arith.constant 0 : index
      %c0_9 = arith.constant 0 : index
      %11 = vector.load %arg2[%c0_8, %c0_9] : memref<16x32xbf16, #tpu.memory_space<vmem>>, vector<16x32xbf16>
      %12 = arith.extf %11 : vector<16x32xbf16> to vector<16x32xf32>
      %cst_10 = arith.constant dense<0.000000e+00> : vector<16xf32>
      %13 = vector.multi_reduction <add>, %12, %cst_10 [1] : vector<16x32xf32> to vector<16xf32>
      %14 = vector.shape_cast %13 : vector<16xf32> to vector<16x1xf32>
      %cst_11 = arith.constant 3.200000e+01 : f32
      %15 = vector.broadcast %cst_11 : f32 to vector<16x1xf32>
      %16 = arith.divf %14, %15 : vector<16x1xf32>
      %17 = vector.broadcast %16 : vector<16x1xf32> to vector<16x32xf32>
      %18 = arith.subf %12, %17 : vector<16x32xf32>
      %19 = vector.broadcast %16 : vector<16x1xf32> to vector<16x32xf32>
      %20 = arith.subf %12, %19 : vector<16x32xf32>
      %21 = arith.mulf %18, %20 : vector<16x32xf32>
      %cst_12 = arith.constant dense<0.000000e+00> : vector<16xf32>
      %22 = vector.multi_reduction <add>, %21, %cst_12 [1] : vector<16x32xf32> to vector<16xf32>
      %23 = vector.shape_cast %22 : vector<16xf32> to vector<16x1xf32>
      %cst_13 = arith.constant 3.200000e+01 : f32
      %24 = vector.broadcast %cst_13 : f32 to vector<16x1xf32>
      %25 = arith.divf %23, %24 : vector<16x1xf32>
      %26 = vector.broadcast %16 : vector<16x1xf32> to vector<16x32xf32>
      %27 = arith.subf %12, %26 : vector<16x32xf32>
      %cst_14 = arith.constant 9.99999974E-6 : f32
      %28 = vector.broadcast %cst_14 : f32 to vector<16x1xf32>
      %29 = arith.addf %25, %28 : vector<16x1xf32>
      %30 = math.rsqrt %29 : vector<16x1xf32>
      %31 = vector.broadcast %30 : vector<16x1xf32> to vector<16x32xf32>
      %32 = arith.mulf %27, %31 : vector<16x32xf32>
      %c0_15 = arith.constant 0 : index
      %c0_16 = arith.constant 0 : index
      %33 = vector.load %arg5[%c0_15, %c0_16] : memref<1x32xf32, #tpu.memory_space<vmem>>, vector<1x32xf32>
      %34 = vector.broadcast %33 : vector<1x32xf32> to vector<16x32xf32>
      %35 = arith.mulf %32, %34 : vector<16x32xf32>
      %c0_17 = arith.constant 0 : index
      %c0_18 = arith.constant 0 : index
      %36 = vector.load %arg6[%c0_17, %c0_18] : memref<1x32xf32, #tpu.memory_space<vmem>>, vector<1x32xf32>
      %37 = vector.broadcast %36 : vector<1x32xf32> to vector<16x32xf32>
      %38 = arith.addf %35, %37 : vector<16x32xf32>
      %39 = arith.truncf %38 : vector<16x32xf32> to vector<16x32xbf16>
      %c0_19 = arith.constant 0 : index
      %c0_20 = arith.constant 0 : index
      %40 = vector.load %arg8[%c0_19, %c0_20] : memref<16x32xbf16, #tpu.memory_space<vmem>>, vector<16x32xbf16>
      tpu.vector_store %arg8[%c0_19, %c0_20], %39 {strides = array<i32>} : memref<16x32xbf16, #tpu.memory_space<vmem>>, vector<16x32xbf16>,
    } else {
    }
    %c0 = arith.constant 0 : index
    %c0_1 = arith.constant 0 : index
    %3 = vector.load %arg8[%c0, %c0_1] : memref<16x32xbf16, #tpu.memory_space<vmem>>, vector<16x32xbf16>
    %c0_2 = arith.constant 0 : index
    %c0_3 = arith.constant 0 : index
    %4 = vector.load %arg3[%c0_2, %c0_3] : memref<32x96xbf16, #tpu.memory_space<vmem>>, vector<32x96xbf16>
    %cst = arith.constant dense<0.000000e+00> : vector<16x96xf32>
    %5 = tpu.matmul %3, %4, %cst {dimension_numbers = #tpu.dot_dimension_numbers<[1], [0], [0], [1], [0, 0, 1, 1], [], []>} : vector<16x32xbf16>, vector<32x96xbf16>, vector<16x96xf32> -> vector<16x96xf32>
    %c0_4 = arith.constant 0 : index
    %c0_5 = arith.constant 0 : index
    %6 = vector.load %arg4[%c0_4, %c0_5] : memref<1x96xf32, #tpu.memory_space<vmem>>, vector<1x96xf32>
    %7 = vector.broadcast %6 : vector<1x96xf32> to vector<16x96xf32>
    %8 = arith.addf %5, %7 : vector<16x96xf32>
    %9 = arith.truncf %8 : vector<16x96xf32> to vector<16x96xbf16>
    %c0_6 = arith.constant 0 : index
    %c0_7 = arith.constant 0 : index
    %10 = vector.load %arg7[%c0_6, %c0_7] : memref<16x96xbf16, #tpu.memory_space<vmem>>, vector<16x96xbf16>
    tpu.vector_store %arg7[%c0_6, %c0_7], %9 {strides = array<i32>} : memref<16x96xbf16, #tpu.memory_space<vmem>>, vector<16x96xbf16>,
    return
  }
  func.func @transform_0(%arg0: i32, %arg1: i32) -> (i32, i32) {
    %c0_i32 = arith.constant 0 : i32
    %c0_i32_0 = arith.constant 0 : i32
    return %arg0, %c0_i32 : i32, i32
  }
  func.func @transform_1(%arg0: i32, %arg1: i32) -> (i32, i32) {
    %c0_i32 = arith.constant 0 : i32
    %c0_i32_0 = arith.constant 0 : i32
    return %c0_i32, %arg1 : i32, i32
  }
  func.func @transform_2(%arg0: i32, %arg1: i32) -> (i32, i32) {
    %c0_i32 = arith.constant 0 : i32
    %c0_i32_0 = arith.constant 0 : i32
    return %c0_i32, %arg1 : i32, i32
  }
  func.func @transform_3(%arg0: i32, %arg1: i32) -> (i32, i32) {
    %c0_i32 = arith.constant 0 : i32
    %c0_i32_0 = arith.constant 0 : i32
    %c0_i32_1 = arith.constant 0 : i32
    return %c0_i32, %c0_i32_0 : i32, i32
  }
  func.func @transform_4(%arg0: i32, %arg1: i32) -> (i32, i32) {
    %c0_i32 = arith.constant 0 : i32
    %c0_i32_0 = arith.constant 0 : i32
    %c0_i32_1 = arith.constant 0 : i32
    return %c0_i32, %c0_i32_0 : i32, i32
  }
  func.func @transform_5(%arg0: i32, %arg1: i32) -> (i32, i32) {
    %c0_i32 = arith.constant 0 : i32
    return %arg0, %arg1 : i32, i32
  }
}

</mosaic_0001>

<llo_original>
// kernel: tpu_custom_call.1
$region0: #{tpu_custom_call.1}
  #allocation0 [shape = 'u32[]', space=smem, size = 0x4, offset = 0x4, fixed_abs, tag = 'smem constant byte address 0x4 - core index']
  #allocation1 [shape = 'u32[72,128]{1,0:T(1,128)}', space=vmem, size = 0x9000, scoped, tag = 'internal scratch']
  #allocation2 [shape = 'bf16[16,32]{1,0:T(8,128)(2,1)}', space=vmem, size = 0x1000, scoped, tag = 'scratch operand']
  %s0 = inlined_call_operand.hbm [shape: bf16[16,32], index: 0, kind: input, shape index: {}]
  %s1 = inlined_call_operand.hbm [shape: bf16[32,96], index: 1, kind: input, shape index: {}]
  %s2 = inlined_call_operand.vmem [shape: f32[1,96], index: 2, kind: input, shape index: {}]
  %s3 = inlined_call_operand.vmem [shape: f32[1,32], index: 3, kind: input, shape index: {}]
  %s4 = inlined_call_operand.vmem [shape: f32[1,32], index: 4, kind: input, shape index: {}]
  %s5 = inlined_call_operand.hbm [shape: bf16[16,96], index: 5, kind: output, shape index: {}]
  %s6 = sld [smem:[#allocation0]]
  $region42: #{tpu_custom_call.1} parent=0
    _
  %s8 = ssub.s32 1, %s6
  %s9 = scalar_select 0, %s8, %s6
  $region1: #{tpu_custom_call.1} parent=0
    #allocation3 [shape = 'u8[4096]{0}', space=vmem, size = 0x1000, scoped, tag = 'input window, operand 0, single buffered']
    #allocation4 [shape = 's32[1]{0}', space=sflag, size = 0x4, scoped, tag = 'scoped memory for tpu_custom_call.1']
    #allocation5 [shape = 's32[1]{0}', space=sflag, size = 0x4, scoped, tag = 'scoped memory for tpu_custom_call.1']
    #allocation6 [shape = 'u8[8192]{0}', space=vmem, size = 0x2000, scoped, tag = 'input window, operand 1, single buffered']
    #allocation7 [shape = 's32[1]{0}', space=sflag, size = 0x4, scoped, tag = 'scoped memory for tpu_custom_call.1']
    #allocation8 [shape = 'u8[4096]{0}', space=vmem, size = 0x1000, scoped, tag = 'output window, operand 0, single buffered']
    %10 = vsyncpa [#allocation4], 0
    %11 = vsyncpa [#allocation7], 0
    %12 = vsyncpa [#allocation5], 0
    // Predicated region
    $region2: #{tpu_custom_call.1} parent=1 // pred_check
      _
    $region3: #{tpu_custom_call.1} parent=1 // pred_check_branch
      %14 = sbr.rel (0) target = $region5
    $region4: #{tpu_custom_call.1} parent=1 // pred_region
      %16 = vsyncadd [#allocation4], 0
      %s17 = sshll.u32 %s0, 4
      %s18 = int_to_ptr.hbm [resolvable:$true] %s17
      %s19 = sshll.u32 [#allocation3], 4
      %s20 = int_to_ptr.vmem [resolvable:$true] %s19
      %25 = dma.hbm_to_vmem [thread:$0]  %s18, 128, %s20, [#allocation4], 64, 64, 4
    $region5: #{tpu_custom_call.1} parent=1 // pred_fallthru
      _
    // Predicated region
    $region6: #{tpu_custom_call.1} parent=1 // pred_check
      _
    $region7: #{tpu_custom_call.1} parent=1 // pred_check_branch
      %27 = sbr.rel (0) target = $region9
    $region8: #{tpu_custom_call.1} parent=1 // pred_region
      %29 = vsyncadd [#allocation7], 0
      %s30 = sshll.u32 %s1, 4
      %s31 = int_to_ptr.hbm [resolvable:$true] %s30
      %s32 = sshll.u32 [#allocation6], 4
      %s33 = int_to_ptr.vmem [resolvable:$true] %s32
      %38 = dma.hbm_to_vmem [thread:$0]  %s31, 256, %s33, [#allocation7], 64, 64, 4
    $region9: #{tpu_custom_call.1} parent=1 // pred_fallthru
      _
    // Predicated region
    $region10: #{tpu_custom_call.1} parent=1 // pred_check
      _
    $region11: #{tpu_custom_call.1} parent=1 // pred_check_branch
      %40 = sbr.rel (0) target = $region13
    $region12: #{tpu_custom_call.1} parent=1 // pred_region
      _
    $region13: #{tpu_custom_call.1} parent=1 // pred_fallthru
      _
    // Predicated region
    $region14: #{tpu_custom_call.1} parent=1 // pred_check
      _
    $region15: #{tpu_custom_call.1} parent=1 // pred_check_branch
      %42 = sbr.rel (0) target = $region17
    $region16: #{tpu_custom_call.1} parent=1 // pred_region
      _
    $region17: #{tpu_custom_call.1} parent=1 // pred_fallthru
      _
    // Predicated region
    $region18: #{tpu_custom_call.1} parent=1 // pred_check
      _
    $region19: #{tpu_custom_call.1} parent=1 // pred_check_branch
      %44 = sbr.rel (0) target = $region21
    $region20: #{tpu_custom_call.1} parent=1 // pred_region
      _
    $region21: #{tpu_custom_call.1} parent=1 // pred_fallthru
      _
    // Predicated region
    $region22: #{tpu_custom_call.1} parent=1 // pred_check
      _
    $region23: #{tpu_custom_call.1} parent=1 // pred_check_branch
      %46 = sbr.rel (0) target = $region25
    $region24: #{tpu_custom_call.1} parent=1 // pred_region
      %48 = dma.done [#allocation4], 128
    $region25: #{tpu_custom_call.1} parent=1 // pred_fallthru
      _
    // Predicated region
    $region26: #{tpu_custom_call.1} parent=1 // pred_check
      _
    $region27: #{tpu_custom_call.1} parent=1 // pred_check_branch
      %50 = sbr.rel (0) target = $region29
    $region28: #{tpu_custom_call.1} parent=1 // pred_region
      %52 = dma.done [#allocation7], 256
    $region29: #{tpu_custom_call.1} parent=1 // pred_fallthru
      _
    %p54 = scmp.eq.s32.totalorder 0, 0
    // Predicated region
    $region30: #{tpu_custom_call.1} parent=1 // pred_check
      %p55 = pneg %p54
    $region31: #{tpu_custom_call.1} parent=1 // pred_check_branch
      %57 = sbr.rel (%p55) target = $region33
    $region32: #{tpu_custom_call.1} parent=1 // pred_region
      %v58 = vld [vmem:[#allocation3] sm:$0xf]
      %v59 = vld [vmem:[#allocation3 + $0x4] sm:$0xf]
      %v60 = vunpack.c.l.bf16 %v58
      %v61 = vunpack.c.l.bf16 %v59
      %vm62 = vcmask 261120
      %v63 = vsel %vm62, %v60, 0.0
      %64 = vadd.xlane.f32.xlu0 %v63
      %v65 = vpop.xlane.xlu0 %64
      %v66 = vsel %vm62, %v61, 0.0
      %67 = vadd.xlane.f32.xlu0 %v66
      %v68 = vpop.xlane.xlu0 %67
      %v69 = vrcp.pop 32.0
      %v70 = vmul.f32 32.0, %v69
      %v71 = vsub.f32 1.0, %v70
      %v72 = vmul.f32 %v69, %v71
      %v73 = vadd.f32 %v69, %v72
      %vm74 = vweird.f32 %v69
      %v75 = vsel %vm74, %v69, %v73
      %v76 = vmul.f32 %v65, %v75
      %v77 = vmul.f32 %v68, %v75
      %v78 = vsub.f32 %v60, %v76
      %v79 = vsub.f32 %v61, %v77
      %v80 = vmul.f32 %v78, %v78
      %v81 = vmul.f32 %v79, %v79
      %v82 = vsel %vm62, %v80, 0.0
      %83 = vadd.xlane.f32.xlu0 %v82
      %v84 = vpop.xlane.xlu0 %83
      %v85 = vsel %vm62, %v81, 0.0
      %86 = vadd.xlane.f32.xlu0 %v85
      %v87 = vpop.xlane.xlu0 %86
      %v88 = vmul.f32 %v84, %v75
      %v89 = vmul.f32 %v87, %v75
      %v90 = vadd.f32 %v88, 1e-05
      %v91 = vadd.f32 %v89, 1e-05
      %v92 = vrsqrt.pop %v90
      %v93 = vmul.f32 %v92, %v90
      %v94 = vmul.f32 %v93, %v92
      %v95 = vmul.f32 0.5, %v94
      %v96 = vsub.f32 1.5, %v95
      %v97 = vmul.f32 %v92, %v96
      %vm98 = vweird.f32 %v90
      %vm99 = vweird.f32 %v92
      %vm100 = vmor %vm98, %vm99
      %v101 = vsel %vm100, %v92, %v97
      %v102 = vrsqrt.pop %v91
      %v103 = vmul.f32 %v102, %v91
      %v104 = vmul.f32 %v103, %v102
      %v105 = vmul.f32 0.5, %v104
      %v106 = vsub.f32 1.5, %v105
      %v107 = vmul.f32 %v102, %v106
      %vm108 = vweird.f32 %v91
      %vm109 = vweird.f32 %v102
      %vm110 = vmor %vm108, %vm109
      %v111 = vsel %vm110, %v102, %v107
      %v112 = vmul.f32 %v78, %v101
      %v113 = vmul.f32 %v79, %v111
      %v114 = vld [vmem:[%s3] sm:$0x1]
      %v116 = vperm.slane %v114, 0
      %v118 = vmul.f32 %v112, %v116
      %v119 = vmul.f32 %v113, %v116
      %v120 = vld [vmem:[%s4] sm:$0x1]
      %v122 = vperm.slane %v120, 0
      %v124 = vadd.f32 %v118, %v122
      %v125 = vadd.f32 %v119, %v122
      %v126 = vpack.c.bf16 %v124, %v124
      %v127 = vpack.c.bf16 %v125, %v125
      %vm128 = vcmask 257024
      %129 = vst.msk [vmem:[#allocation2] sm:$0xf] %vm128, %v126
      %130 = vst.msk [vmem:[#allocation2 + $0x4] sm:$0xf] %vm128, %v127
    $region33: #{tpu_custom_call.1} parent=1 // pred_fallthru
      _
    %v131 = vld [vmem:[#allocation2] sm:$0xf]
    %v132 = vld [vmem:[#allocation2 + $0x4] sm:$0xf]
    %v133 = vld [vmem:[#allocation6] sm:$0xf]
    %v134 = vld [vmem:[#allocation6 + $0x4] sm:$0xf]
    %v135 = vld [vmem:[#allocation6 + $0x8] sm:$0xf]
    %v136 = vld [vmem:[#allocation6 + $0xc] sm:$0xf]
    %v137 = vld [vmem:[%s2] sm:$0x1]
    %v139 = vperm.slane %v137, 0
    %v143 = vunpack.c.l.b16 %v131
    %v144 = vunpack.c.l.b16 %v132
    %v145 = vpack.c.b16 %v144, %v143
    %v150 = vunpack.c.l.b16 %v133
    %v151 = vunpack.c.l.b16 %v134
    %v152 = vunpack.c.l.b16 %v135
    %v153 = vunpack.c.l.b16 %v136
    %v154 = vpack.c.b16 %v151, %v150
    %v155 = vpack.c.b16 %v153, %v152
    %vm158 = vcmask 261120
    %v160 = vsel %vm158, %v145, 0
    %162 = vmatpush.bf16.msra.mxu0 0
    %163 = vmatpush.bf16.msra.mxu0 0
    %164 = vmatpush.bf16.msra.mxu0 0
    %165 = vmatpush.bf16.msra.mxu0 0
    %166 = vmatpush.bf16.msra.mxu0 0
    %167 = vmatpush.bf16.msra.mxu0 0
    %168 = vmatpush.bf16.msra.mxu0 %v155
    %169 = vmatpush.bf16.msra.mxu0 %v154
    %170 = vmatmul.bf16.gmra.mxu0 %v160
    %v171 = vpop.f32.mrf.mxu0
    %v172 = vadd.f32 %v139, %v171
    %v173 = vpop.f32.mrf.mxu0
    %v174 = vadd.f32 %v139, %v173
    %175 = vdwg.mxu0
    %v176 = vpack.c.bf16 %v172, %v172
    %v177 = vpack.c.bf16 %v174, %v174
    %vm178 = vcmask 781312
    %179 = vst.msk [vmem:[#allocation8] sm:$0xf] %vm178, %v176
    %180 = vst.msk [vmem:[#allocation8 + $0x4] sm:$0xf] %vm178, %v177
    // Predicated region
    $region34: #{tpu_custom_call.1} parent=1 // pred_check
      _
    $region35: #{tpu_custom_call.1} parent=1 // pred_check_branch
      %182 = sbr.rel (0) target = $region37
    $region36: #{tpu_custom_call.1} parent=1 // pred_region
      %184 = vsyncadd [#allocation5], 0
      %s185 = sshll.u32 [#allocation8], 4
      %s186 = int_to_ptr.vmem [resolvable:$true] %s185
      %s187 = sshll.u32 %s5, 4
      %s188 = int_to_ptr.hbm [resolvable:$true] %s187
      %193 = dma.vmem_to_hbm [thread:$0]  %s186, 128, %s188, [#allocation5], 64, 64, 4
    $region37: #{tpu_custom_call.1} parent=1 // pred_fallthru
      _
    // Predicated region
    $region38: #{tpu_custom_call.1} parent=1 // pred_check
      _
    $region39: #{tpu_custom_call.1} parent=1 // pred_check_branch
      %195 = sbr.rel (0) target = $region41
    $region40: #{tpu_custom_call.1} parent=1 // pred_region
      %197 = dma.done [#allocation5], 128
    $region41: #{tpu_custom_call.1} parent=1 // pred_fallthru
      _
    %198 = vsyncpa [#allocation4], 1
    %199 = vsyncpa [#allocation7], 1
    %200 = vsyncpa [#allocation5], 1

</llo_original>
